<compile_context>
chip_gen: v7x
topology: tpu7x:2x2x1
jax: 0.10.0
libtpu: 0.0.40
codegen_flags: <defaults>
</compile_context>

<pallas_src>
import functools

import jax
import jax.numpy as jnp
import numpy as np
from jax.experimental import pallas as pl
from jax.experimental.pallas import tpu as pltpu


# -----------------------------------------------------------------------------
# Pallas kernel 1: fused 1x1-conv (channels-last matmul) + folded-BN bias
#                  (+ optional fused shortcut conv, + residual add, + ReLU)
# Rows are the flattened (B*N) point axis; channels live on lanes.
# -----------------------------------------------------------------------------
def _conv_bn_kernel(*refs, relu, has_residual, has_shortcut):
    if has_shortcut:
        x_ref, w_ref, b_ref, id_ref, wsc_ref, bsc_ref, o_ref = refs
    elif has_residual:
        x_ref, w_ref, b_ref, id_ref, o_ref = refs
    else:
        x_ref, w_ref, b_ref, o_ref = refs

    # x/w are already bf16 -> native MXU rate, f32 accumulation.
    y = jnp.dot(x_ref[...], w_ref[...],
                preferred_element_type=jnp.float32)            # (TN, Cout)
    y = y + b_ref[...]                                         # folded BN shift

    if has_shortcut:
        # identity projection (shortcut 1x1 conv + BN) fused into the same kernel
        y = y + jnp.dot(id_ref[...], wsc_ref[...],
                        preferred_element_type=jnp.float32) + bsc_ref[...]
    elif has_residual:
        y = y + id_ref[...].astype(jnp.float32)

    if relu:
        y = jnp.maximum(y, 0.0)
    o_ref[...] = y.astype(o_ref.dtype)


def conv1x1_bn(x, w, scale, shift, *, relu=False, residual=None, shortcut=None,
               tn=512, out_dtype=jnp.bfloat16):
    """Fused 1x1 Conv1d + eval-mode BatchNorm (+shortcut conv, +residual, +ReLU).

    x: (B, N, Cin) channels-last.  w: (Cout, Cin) (PyTorch Conv1d layout).
    scale/shift: (Cout,) BN affine.  residual: optional (B, N, Cres); if
    `shortcut=(w_sc, scale_sc, shift_sc)` it is projected Cres->Cout inside the
    same kernel.  Returns (B, N, Cout) in `out_dtype` (bf16 by default).
    """
    B, N, Cin = x.shape
    Cout = w.shape[0]
    R = B * N                                   # flatten batch*points into rows

    # Fold BN scale into the weight (bf16), BN shift becomes an f32 bias row.
    w_f = (w.astype(jnp.float32)
           * scale.astype(jnp.float32)[:, None]).T.astype(jnp.bfloat16)  # (Cin, Cout)
    b_f = shift.reshape(1, Cout).astype(jnp.float32)

    x2 = x.reshape(R, Cin).astype(jnp.bfloat16)

    TN = R if R <= tn else tn                   # tn is a multiple of 8
    grid = (pl.cdiv(R, TN),)

    in_specs = [
        pl.BlockSpec((TN, Cin), lambda r: (r, 0)),
        pl.BlockSpec((Cin, Cout), lambda r: (0, 0)),
        pl.BlockSpec((1, Cout), lambda r: (0, 0)),
    ]
    args = [x2, w_f, b_f]
    flops = 2 * R * Cin * Cout
    bytes_accessed = 2 * R * Cin + 2 * Cin * Cout + 4 * Cout + 2 * R * Cout

    has_residual = residual is not None
    has_shortcut = shortcut is not None
    if has_residual:
        Cres = residual.shape[-1]
        res2 = residual.reshape(R, Cres).astype(jnp.bfloat16)
        in_specs.append(pl.BlockSpec((TN, Cres), lambda r: (r, 0)))
        args.append(res2)
        bytes_accessed += 2 * R * Cres
        if has_shortcut:
            w_sc, scale_sc, shift_sc = shortcut
            wsc_f = (w_sc.astype(jnp.float32)
                     * scale_sc.astype(jnp.float32)[:, None]).T.astype(jnp.bfloat16)
            bsc_f = shift_sc.reshape(1, Cout).astype(jnp.float32)
            in_specs += [pl.BlockSpec((Cres, Cout), lambda r: (0, 0)),
                         pl.BlockSpec((1, Cout), lambda r: (0, 0))]
            args += [wsc_f, bsc_f]
            flops += 2 * R * Cres * Cout
            bytes_accessed += 2 * Cres * Cout + 4 * Cout

    kernel = functools.partial(_conv_bn_kernel, relu=relu,
                               has_residual=has_residual,
                               has_shortcut=has_shortcut)
    out = pl.pallas_call(
        kernel,
        out_shape=jax.ShapeDtypeStruct((R, Cout), out_dtype),
        grid=grid,
        in_specs=in_specs,
        out_specs=pl.BlockSpec((TN, Cout), lambda r: (r, 0)),
        compiler_params=pltpu.CompilerParams(
            dimension_semantics=("parallel",)),
        cost_estimate=pl.CostEstimate(flops=int(flops), transcendentals=0,
                                      bytes_accessed=int(bytes_accessed)),
    )(*args)
    return out.reshape(B, N, Cout)


# -----------------------------------------------------------------------------
# Pallas kernel 2: max over K gathered neighbors (channels-last).
# Invalid neighbors are pre-masked to -inf in the gather, so the kernel is a
# pure unrolled K-way VPU maximum chain; C stays on lanes.
# -----------------------------------------------------------------------------
def _max_over_k_kernel(f_ref, o_ref, *, K):
    # f_ref: (K, TQ, C), o_ref: (TQ, C)
    acc = f_ref[0]
    for k in range(1, K):                      # K is small (4-32): unroll
        acc = jnp.maximum(acc, f_ref[k])
    # queries with no valid neighbor (acc stayed -inf) -> 0
    neg_inf = jnp.array(-jnp.inf, acc.dtype)
    o_ref[...] = jnp.where(acc > neg_inf, acc,
                           jnp.zeros_like(acc)).astype(o_ref.dtype)


def masked_max(gathered, *, tq=128, out_dtype=jnp.bfloat16):
    """gathered: (B, K, Nq, C) with invalid neighbors already -inf -> (B, Nq, C)."""
    B, K, Nq, C = gathered.shape
    TQ = Nq if Nq <= tq else tq
    grid = (B, pl.cdiv(Nq, TQ))
    return pl.pallas_call(
        functools.partial(_max_over_k_kernel, K=K),
        out_shape=jax.ShapeDtypeStruct((B, Nq, C), out_dtype),
        grid=grid,
        in_specs=[pl.BlockSpec((None, K, TQ, C), lambda b, q: (b, 0, q, 0))],
        out_specs=pl.BlockSpec((None, TQ, C), lambda b, q: (b, q, 0)),
        compiler_params=pltpu.CompilerParams(
            dimension_semantics=("parallel", "parallel")),
    )(gathered)


# -----------------------------------------------------------------------------
# Plain-JAX glue: neighbor search + gathers (data-dependent indexing)
# -----------------------------------------------------------------------------
def knn_indices(query_xyz, support_xyz, support_mask, nsample):
    """kNN indices. query: (B, Nq, 3), support: (B, N, 3) -> (B, Nq, K)."""
    # TODO(synk): original code uses radius ball-query; approximated with kNN here.
    N = support_xyz.shape[1]
    k = min(nsample, N)
    # matmul form: ||q||^2 + ||s||^2 - 2 q.s^T  (no (B, Nq, N, 3) tensor)
    qn = jnp.sum(query_xyz * query_xyz, axis=-1)                 # (B, Nq)
    sn = jnp.sum(support_xyz * support_xyz, axis=-1)             # (B, N)
    cross = jnp.einsum('bqd,bnd->bqn', query_xyz, support_xyz)   # (B, Nq, N)
    d2 = qn[:, :, None] + sn[None if False else slice(None), None, :] - 2.0 * cross
    d2 = jnp.where(support_mask[:, None, :] > 0, d2, 1e10)
    _, idx = jax.lax.top_k(-d2, k)
    return idx


def _gather_masked_neighbors(features_nlc, support_mask, idx):
    """features_nlc: (B, N, C) bf16, idx: (B, Nq, K) -> (B, K, Nq, C) with
    invalid neighbors set to -inf (mask folded into the gather)."""
    idx_t = jnp.transpose(idx, (0, 2, 1))                           # (B, K, Nq)
    gathered = jax.vmap(lambda f, i: f[i])(features_nlc, idx_t)     # (B, K, Nq, C)
    nmask = jax.vmap(lambda m, i: m[i])(support_mask, idx_t)        # (B, K, Nq)
    neg_inf = jnp.array(-jnp.inf, gathered.dtype)
    return jnp.where((nmask > 0)[..., None], gathered, neg_inf)


def local_aggregation(query_xyz, support_xyz, query_mask, support_mask,
                      features_nlc, nsample):
    """Simplified LocalAggregation: masked max-pool over kNN neighborhood."""
    # TODO(synk): exact LocalAggregation variant (e.g. pospool position encoding)
    # is not defined in the provided module; masked-max aggregation is used.
    # TODO(synk): invalid *query* points are not zeroed (matches unmasked output).
    idx = knn_indices(query_xyz, support_xyz, support_mask, nsample)
    gathered = _gather_masked_neighbors(features_nlc, support_mask, idx)
    return masked_max(gathered)


def masked_max_pool(xyz, mask, features_nlc, npoint, nsample):
    """MaskedMaxPool: subsample points then max-pool features over neighbors."""
    # TODO(synk): grid (voxel) subsampling replaced by taking the first npoint points.
    sub_xyz = xyz[:, :npoint, :]
    sub_mask = mask[:, :npoint]
    idx = knn_indices(sub_xyz, xyz, mask, nsample)
    gathered = _gather_masked_neighbors(features_nlc, mask, idx)
    sub_features = masked_max(gathered)
    return sub_xyz, sub_mask, sub_features


# -----------------------------------------------------------------------------
# Parameter construction (deterministic, synthetic)
# -----------------------------------------------------------------------------
_BN_EPS = 1e-5


def init_conv_bn(key, cin, cout):
    w = jax.random.normal(key, (cout, cin), jnp.float32) * (1.0 / np.sqrt(cin))
    # gamma=1, beta=0, running_mean=0, running_var=1 (eval-mode BN, pre-folded)
    scale = jnp.ones((cout,), jnp.float32) / jnp.sqrt(1.0 + _BN_EPS)
    shift = jnp.zeros((cout,), jnp.float32)
    return {"w": w, "scale": scale, "shift": shift}


def init_bottleneck(keys, cin, cout, ratio):
    mid = cout // ratio
    p = {
        "conv1": init_conv_bn(next(keys), cin, mid),
        "conv2": init_conv_bn(next(keys), mid, cout),
    }
    if cin != cout:
        p["shortcut"] = init_conv_bn(next(keys), cin, cout)
    return p


def build_params(key, input_features_dim, width, depth, ratio):
    keys = iter(jax.random.split(key, 128))
    params = {"conv1": init_conv_bn(next(keys), input_features_dim, width // 2),
              "btnk1": init_bottleneck(keys, width // 2, width, ratio)}
    w = width
    for li in range(1, 5):
        layer = [init_bottleneck(keys, w, 2 * w, ratio)]  # strided bottleneck
        w *= 2
        for _ in range(depth - 1):
            layer.append(init_bottleneck(keys, w, w, ratio))
        params[f"layer{li}"] = layer
    return params


# -----------------------------------------------------------------------------
# Forward pass (features channels-last (B, N, C) bf16 internally)
# -----------------------------------------------------------------------------
def bottleneck_forward(p, xyz, mask, features, nsample, npoint=None,
                       downsample=False):
    if downsample:
        query_xyz, query_mask, identity = masked_max_pool(
            xyz, mask, features, npoint, nsample)
    else:
        query_xyz, query_mask, identity = xyz, mask, features

    out = conv1x1_bn(features, p["conv1"]["w"], p["conv1"]["scale"],
                     p["conv1"]["shift"], relu=True)
    out = local_aggregation(query_xyz, xyz, query_mask, mask, out, nsample)

    shortcut = None
    if "shortcut" in p:
        shortcut = (p["shortcut"]["w"], p["shortcut"]["scale"],
                    p["shortcut"]["shift"])
    # conv2 + BN + shortcut projection + residual add + final ReLU: one kernel
    out = conv1x1_bn(out, p["conv2"]["w"], p["conv2"]["scale"],
                     p["conv2"]["shift"], relu=True, residual=identity,
                     shortcut=shortcut)
    return query_xyz, query_mask, out


def _to_end_points(f_nlc):
    # PyTorch contract: (B, C, N), float32.
    return jnp.transpose(f_nlc, (0, 2, 1)).astype(jnp.float32)


def resnet_forward(params, xyz, mask, features_cf, nsamples, npoints):
    """features_cf: (B, Cin, N) channels-first, like the PyTorch module."""
    end_points = {}
    f = jnp.transpose(features_cf, (0, 2, 1))     # -> channels-last (B, N, Cin)
    # TODO(synk): stem conv (Cin=4) has negligible MXU contraction depth; a
    # VPU broadcast-FMA formulation would avoid masked stores but is omitted.
    f = conv1x1_bn(f, params["conv1"]["w"], params["conv1"]["scale"],
                   params["conv1"]["shift"], relu=True)
    f = local_aggregation(xyz, xyz, mask, mask, f, nsamples[0])
    xyz, mask, f = bottleneck_forward(params["btnk1"], xyz, mask, f, nsamples[0])
    end_points["res1_xyz"], end_points["res1_mask"] = xyz, mask
    end_points["res1_features"] = _to_end_points(f)

    for li in range(1, 5):
        layer = params[f"layer{li}"]
        # strided bottleneck uses nsamples[li-1] and npoints[li-1]
        xyz, mask, f = bottleneck_forward(layer[0], xyz, mask, f,
                                          nsamples[li - 1],
                                          npoint=npoints[li - 1],
                                          downsample=True)
        # remaining bottlenecks use nsamples[li]
        for p in layer[1:]:
            xyz, mask, f = bottleneck_forward(p, xyz, mask, f, nsamples[li])
        end_points[f"res{li + 1}_xyz"] = xyz
        end_points[f"res{li + 1}_mask"] = mask
        end_points[f"res{li + 1}_features"] = _to_end_points(f)
    return end_points


# -----------------------------------------------------------------------------
# Main
# -----------------------------------------------------------------------------
if __name__ == "__main__":
    B = 2
    N = 64
    input_features_dim = 4
    width = 16
    depth = 2
    bottleneck_ratio = 2
    nsamples = [8, 8, 8, 8, 4]
    npoints = [32, 16, 8, 4]

    key = jax.random.PRNGKey(0)
    k_xyz, k_feat, k_params = jax.random.split(key, 3)

    xyz = jax.random.uniform(k_xyz, (B, N, 3), jnp.float32)          # (B, N, 3)
    mask = jnp.ones((B, N), jnp.float32)                             # (B, N)
    features = jax.random.normal(k_feat, (B, input_features_dim, N), jnp.float32)

    params = build_params(k_params, input_features_dim, width, depth,
                          bottleneck_ratio)

    end_points = resnet_forward(params, xyz, mask, features, nsamples, npoints)

    for v in jax.tree_util.tree_leaves(end_points):
        jax.block_until_ready(v)

    # sanity on shapes of the deepest stage (PyTorch (B, C, N) contract)
    assert end_points["res5_features"].shape == (B, width * 16, npoints[3])
    assert end_points["res5_xyz"].shape == (B, npoints[3], 3)
    assert bool(jnp.all(jnp.isfinite(end_points["res5_features"])))
    print("KERNEL_OK")
</pallas_src>

<mosaic_0001>
module attributes {stable_mosaic.version = 11 : i64} {
  func.func @_conv_bn_kernel(%arg0: i32, %arg1: memref<128x4xbf16, #tpu.memory_space<vmem>>, %arg2: memref<4x8xbf16, #tpu.memory_space<vmem>>, %arg3: memref<1x8xf32, #tpu.memory_space<vmem>>, %arg4: memref<128x8xbf16, #tpu.memory_space<vmem>>) attributes {dimension_semantics = [#tpu.dimension_semantics<parallel>], iteration_bounds = array<i64: 1>, scalar_prefetch = 0 : i64, scratch_operands = 0 : i64, tpu.core_type = #tpu.core_type<tc>, window_params = [{transform_indices = @transform_0, window_bounds = array<i64: 128, 4>}, {pipeline_mode = #tpu.pipeline_mode<synchronous>, transform_indices = @transform_1, window_bounds = array<i64: 4, 8>}, {pipeline_mode = #tpu.pipeline_mode<synchronous>, transform_indices = @transform_2, window_bounds = array<i64: 1, 8>}, {transform_indices = @transform_3, window_bounds = array<i64: 128, 8>}]} {
    %c0 = arith.constant 0 : index
    %c0_0 = arith.constant 0 : index
    %0 = vector.load %arg1[%c0, %c0_0] : memref<128x4xbf16, #tpu.memory_space<vmem>>, vector<128x4xbf16>
    %c0_1 = arith.constant 0 : index
    %c0_2 = arith.constant 0 : index
    %1 = vector.load %arg2[%c0_1, %c0_2] : memref<4x8xbf16, #tpu.memory_space<vmem>>, vector<4x8xbf16>
    %cst = arith.constant dense<0.000000e+00> : vector<128x8xf32>
    %2 = tpu.matmul %0, %1, %cst {dimension_numbers = #tpu.dot_dimension_numbers<[1], [0], [0], [1], [0, 0, 1, 1], [], []>} : vector<128x4xbf16>, vector<4x8xbf16>, vector<128x8xf32> -> vector<128x8xf32>
    %c0_3 = arith.constant 0 : index
    %c0_4 = arith.constant 0 : index
    %3 = vector.load %arg3[%c0_3, %c0_4] : memref<1x8xf32, #tpu.memory_space<vmem>>, vector<1x8xf32>
    %4 = vector.broadcast %3 : vector<1x8xf32> to vector<128x8xf32>
    %5 = arith.addf %2, %4 : vector<128x8xf32>
    %cst_5 = arith.constant 0.000000e+00 : f32
    %6 = vector.broadcast %cst_5 : f32 to vector<128x8xf32>
    %7 = arith.maximumf %5, %6 : vector<128x8xf32>
    %8 = arith.truncf %7 : vector<128x8xf32> to vector<128x8xbf16>
    %c0_6 = arith.constant 0 : index
    %c0_7 = arith.constant 0 : index
    %9 = vector.load %arg4[%c0_6, %c0_7] : memref<128x8xbf16, #tpu.memory_space<vmem>>, vector<128x8xbf16>
    tpu.vector_store %arg4[%c0_6, %c0_7], %8 {strides = array<i32>} : memref<128x8xbf16, #tpu.memory_space<vmem>>, vector<128x8xbf16>,
    return
  }
  func.func @transform_0(%arg0: i32) -> (i32, i32) {
    %c0_i32 = arith.constant 0 : i32
    %c0_i32_0 = arith.constant 0 : i32
    return %arg0, %c0_i32 : i32, i32
  }
  func.func @transform_1(%arg0: i32) -> (i32, i32) {
    %c0_i32 = arith.constant 0 : i32
    %c0_i32_0 = arith.constant 0 : i32
    %c0_i32_1 = arith.constant 0 : i32
    return %c0_i32, %c0_i32_0 : i32, i32
  }
  func.func @transform_2(%arg0: i32) -> (i32, i32) {
    %c0_i32 = arith.constant 0 : i32
    %c0_i32_0 = arith.constant 0 : i32
    %c0_i32_1 = arith.constant 0 : i32
    return %c0_i32, %c0_i32_0 : i32, i32
  }
  func.func @transform_3(%arg0: i32) -> (i32, i32) {
    %c0_i32 = arith.constant 0 : i32
    %c0_i32_0 = arith.constant 0 : i32
    return %arg0, %c0_i32 : i32, i32
  }
}

</mosaic_0001>

<llo_original>
// kernel: tpu_custom_call.1
$region0: #{tpu_custom_call.1}
  #allocation0 [shape = 'u32[]', space=smem, size = 0x4, offset = 0x4, fixed_abs, tag = 'smem constant byte address 0x4 - core index']
  #allocation1 [shape = 'u32[144,128]{1,0:T(1,128)}', space=vmem, size = 0x12000, scoped, tag = 'internal scratch']
  %s0 = inlined_call_operand.vmem [shape: bf16[128,4], index: 0, kind: input, shape index: {}]
  %s1 = inlined_call_operand.vmem [shape: bf16[4,8], index: 1, kind: input, shape index: {}]
  %s2 = inlined_call_operand.vmem [shape: f32[1,8], index: 2, kind: input, shape index: {}]
  %s3 = inlined_call_operand.vmem [shape: bf16[128,8], index: 3, kind: output, shape index: {}]
  %s4 = sld [smem:[#allocation0]]
  $region22: #{tpu_custom_call.1} parent=0
    _
  %s6 = ssub.s32 1, %s4
  %s7 = scalar_select 0, %s6, %s4
  // Predicated region
  $region2: #{tpu_custom_call.1} parent=0 // pred_check
    _
  $region3: #{tpu_custom_call.1} parent=0 // pred_check_branch
    %9 = sbr.rel (0) target = $region5
  $region4: #{tpu_custom_call.1} parent=0 // pred_region
    _
  $region5: #{tpu_custom_call.1} parent=0 // pred_fallthru
    _
  // Predicated region
  $region6: #{tpu_custom_call.1} parent=0 // pred_check
    _
  $region7: #{tpu_custom_call.1} parent=0 // pred_check_branch
    %11 = sbr.rel (0) target = $region9
  $region8: #{tpu_custom_call.1} parent=0 // pred_region
    _
  $region9: #{tpu_custom_call.1} parent=0 // pred_fallthru
    _
  // Predicated region
  $region10: #{tpu_custom_call.1} parent=0 // pred_check
    _
  $region11: #{tpu_custom_call.1} parent=0 // pred_check_branch
    %13 = sbr.rel (0) target = $region13
  $region12: #{tpu_custom_call.1} parent=0 // pred_region
    _
  $region13: #{tpu_custom_call.1} parent=0 // pred_fallthru
    _
  %v15 = vld [vmem:[%s0] sm:$0xf]
  %v16 = vld [vmem:[%s0 + $0x4] sm:$0xf]
  %v17 = vld [vmem:[%s0 + $0x8] sm:$0xf]
  %v18 = vld [vmem:[%s0 + $0xc] sm:$0xf]
  %v19 = vld [vmem:[%s0 + $0x10] sm:$0xf]
  %v20 = vld [vmem:[%s0 + $0x14] sm:$0xf]
  %v21 = vld [vmem:[%s0 + $0x18] sm:$0xf]
  %v22 = vld [vmem:[%s0 + $0x1c] sm:$0xf]
  %v23 = vld [vmem:[%s0 + $0x20] sm:$0xf]
  %v24 = vld [vmem:[%s0 + $0x24] sm:$0xf]
  %v25 = vld [vmem:[%s0 + $0x28] sm:$0xf]
  %v26 = vld [vmem:[%s0 + $0x2c] sm:$0xf]
  %v27 = vld [vmem:[%s0 + $0x30] sm:$0xf]
  %v28 = vld [vmem:[%s0 + $0x34] sm:$0xf]
  %v29 = vld [vmem:[%s0 + $0x38] sm:$0xf]
  %v30 = vld [vmem:[%s0 + $0x3c] sm:$0xf]
  %v31 = vld [vmem:[%s1] sm:$0x3]
  %v32 = vld [vmem:[%s2] sm:$0x1]
  %v34 = vlaneseq
  %v35 = vshrl.u32 %v34, 7
  %v36 = vsub.s32 0, %v35
  %v37 = vrot.slane %v32, %v36
  %v55 = vunpack.c.l.b16 %v15
  %v56 = vunpack.c.l.b16 %v16
  %v57 = vunpack.c.l.b16 %v17
  %v58 = vunpack.c.l.b16 %v18
  %v59 = vunpack.c.l.b16 %v19
  %v60 = vunpack.c.l.b16 %v20
  %v61 = vunpack.c.l.b16 %v21
  %v62 = vunpack.c.l.b16 %v22
  %v63 = vunpack.c.l.b16 %v23
  %v64 = vunpack.c.l.b16 %v24
  %v65 = vunpack.c.l.b16 %v25
  %v66 = vunpack.c.l.b16 %v26
  %v67 = vunpack.c.l.b16 %v27
  %v68 = vunpack.c.l.b16 %v28
  %v69 = vunpack.c.l.b16 %v29
  %v70 = vunpack.c.l.b16 %v30
  %v71 = vpack.c.b16 %v56, %v55
  %v72 = vpack.c.b16 %v58, %v57
  %v73 = vpack.c.b16 %v60, %v59
  %v74 = vpack.c.b16 %v62, %v61
  %v75 = vpack.c.b16 %v64, %v63
  %v76 = vpack.c.b16 %v66, %v65
  %v77 = vpack.c.b16 %v68, %v67
  %v78 = vpack.c.b16 %v70, %v69
  %vm79 = vcmask 31744
  %v81 = vsel %vm79, %v71, 0
  %v84 = vsel %vm79, %v72, 0
  %v87 = vsel %vm79, %v73, 0
  %v90 = vsel %vm79, %v74, 0
  %v93 = vsel %vm79, %v75, 0
  %v96 = vsel %vm79, %v76, 0
  %v99 = vsel %vm79, %v77, 0
  %v102 = vsel %vm79, %v78, 0
  %vm104 = vcmask 1041408
  %v106 = vsel %vm104, %v31, 0
  %108 = vmatprep.subr.bf16.mxu0 0
  %109 = vmatpush1.bf16.msra.mxu0 %v106
  %110 = vmatprep.subr.bf16.mxu0 0
  %111 = vmatpush1.bf16.msra.mxu0 0
  %112 = vmatprep.subr.bf16.mxu0 0
  %113 = vmatpush1.bf16.msra.mxu0 0
  %114 = vmatprep.subr.bf16.mxu0 0
  %115 = vmatpush1.bf16.msra.mxu0 0
  %116 = vmatprep.subr.bf16.mxu0 0
  %117 = vmatpush1.bf16.msra.mxu0 0
  %118 = vmatprep.subr.bf16.mxu0 0
  %119 = vmatpush1.bf16.msra.mxu0 0
  %120 = vmatprep.subr.bf16.mxu0 0
  %121 = vmatpush1.bf16.msra.mxu0 0
  %122 = vmatprep.subr.bf16.mxu0 0
  %123 = vmatpush1.bf16.msra.mxu0 0
  %124 = vmatprep.subr.bf16.mxu0 0
  %125 = vmatpush1.bf16.msra.mxu0 0
  %126 = vmatprep.subr.bf16.mxu0 0
  %127 = vmatpush1.bf16.msra.mxu0 0
  %128 = vmatprep.subr.bf16.mxu0 0
  %129 = vmatpush1.bf16.msra.mxu0 0
  %130 = vmatprep.subr.bf16.mxu0 0
  %131 = vmatpush1.bf16.msra.mxu0 0
  %132 = vmatprep.subr.bf16.mxu0 0
  %133 = vmatpush1.bf16.msra.mxu0 0
  %134 = vmatprep.subr.bf16.mxu0 0
  %135 = vmatpush1.bf16.msra.mxu0 0
  %136 = vmatprep.subr.bf16.mxu0 0
  %137 = vmatpush1.bf16.msra.mxu0 0
  %138 = vmatprep.subr.bf16.mxu0 0
  %139 = vmatpush1.bf16.msra.mxu0 0
  %140 = vmatprep.mubr.bf16.mxu0 0
  %141 = vmatmul.mubr.bf16.gmra.mrb[0].mxu0 %v81
  %v142 = vpop.f32.mrb[0].mxu0
  %v143 = vadd.f32 %v37, %v142
  %v144 = vpop.f32.mrb[0].mxu0
  %v145 = vpop.f32.mrb[0].mxu0
  %v146 = vadd.f32 %v37, %v145
  %v147 = vpop.f32.mrb[0].mxu0
  %148 = vmatprep.mubr.bf16.mxu0 0
  %149 = vmatmul.mubr.bf16.gmra.mrb[0].mxu0 %v84
  %v150 = vpop.f32.mrb[0].mxu0
  %v151 = vadd.f32 %v37, %v150
  %v152 = vpop.f32.mrb[0].mxu0
  %v153 = vpop.f32.mrb[0].mxu0
  %v154 = vadd.f32 %v37, %v153
  %v155 = vpop.f32.mrb[0].mxu0
  %156 = vmatprep.mubr.bf16.mxu0 0
  %157 = vmatmul.mubr.bf16.gmra.mrb[0].mxu0 %v87
  %v158 = vpop.f32.mrb[0].mxu0
  %v159 = vadd.f32 %v37, %v158
  %v160 = vpop.f32.mrb[0].mxu0
  %v161 = vpop.f32.mrb[0].mxu0
  %v162 = vadd.f32 %v37, %v161
  %v163 = vpop.f32.mrb[0].mxu0
  %164 = vmatprep.mubr.bf16.mxu0 0
  %165 = vmatmul.mubr.bf16.gmra.mrb[0].mxu0 %v90
  %v166 = vpop.f32.mrb[0].mxu0
  %v167 = vadd.f32 %v37, %v166
  %v168 = vpop.f32.mrb[0].mxu0
  %v169 = vpop.f32.mrb[0].mxu0
  %v170 = vadd.f32 %v37, %v169
  %v171 = vpop.f32.mrb[0].mxu0
  %172 = vmatprep.mubr.bf16.mxu0 0
  %173 = vmatmul.mubr.bf16.gmra.mrb[0].mxu0 %v93
  %v174 = vpop.f32.mrb[0].mxu0
  %v175 = vadd.f32 %v37, %v174
  %v176 = vpop.f32.mrb[0].mxu0
  %v177 = vpop.f32.mrb[0].mxu0
  %v178 = vadd.f32 %v37, %v177
  %v179 = vpop.f32.mrb[0].mxu0
  %180 = vmatprep.mubr.bf16.mxu0 0
  %181 = vmatmul.mubr.bf16.gmra.mrb[0].mxu0 %v96
  %v182 = vpop.f32.mrb[0].mxu0
  %v183 = vadd.f32 %v37, %v182
  %v184 = vpop.f32.mrb[0].mxu0
  %v185 = vpop.f32.mrb[0].mxu0
  %v186 = vadd.f32 %v37, %v185
  %v187 = vpop.f32.mrb[0].mxu0
  %188 = vmatprep.mubr.bf16.mxu0 0
  %189 = vmatmul.mubr.bf16.gmra.mrb[0].mxu0 %v99
  %v190 = vpop.f32.mrb[0].mxu0
  %v191 = vadd.f32 %v37, %v190
  %v192 = vpop.f32.mrb[0].mxu0
  %v193 = vpop.f32.mrb[0].mxu0
  %v194 = vadd.f32 %v37, %v193
  %v195 = vpop.f32.mrb[0].mxu0
  %196 = vmatprep.mubr.bf16.mxu0 0
  %197 = vmatmul.mubr.bf16.gmra.mrb[0].mxu0 %v102
  %v198 = vpop.f32.mrb[0].mxu0
  %v199 = vadd.f32 %v37, %v198
  %v200 = vpop.f32.mrb[0].mxu0
  %v201 = vpop.f32.mrb[0].mxu0
  %v202 = vadd.f32 %v37, %v201
  %v203 = vpop.f32.mrb[0].mxu0
  %204 = vdwg.mxu0
  %v205 = vmax.f32 %v143, 0.0
  %v206 = vmax.f32 %v146, 0.0
  %v207 = vmax.f32 %v151, 0.0
  %v208 = vmax.f32 %v154, 0.0
  %v209 = vmax.f32 %v159, 0.0
  %v210 = vmax.f32 %v162, 0.0
  %v211 = vmax.f32 %v167, 0.0
  %v212 = vmax.f32 %v170, 0.0
  %v213 = vmax.f32 %v175, 0.0
  %v214 = vmax.f32 %v178, 0.0
  %v215 = vmax.f32 %v183, 0.0
  %v216 = vmax.f32 %v186, 0.0
  %v217 = vmax.f32 %v191, 0.0
  %v218 = vmax.f32 %v194, 0.0
  %v219 = vmax.f32 %v199, 0.0
  %v220 = vmax.f32 %v202, 0.0
  %v221 = vpack.c.bf16 %v206, %v205
  %v222 = vpack.c.bf16 %v208, %v207
  %v223 = vpack.c.bf16 %v210, %v209
  %v224 = vpack.c.bf16 %v212, %v211
  %v225 = vpack.c.bf16 %v214, %v213
  %v226 = vpack.c.bf16 %v216, %v215
  %v227 = vpack.c.bf16 %v218, %v217
  %v228 = vpack.c.bf16 %v220, %v219
  %v237 = vunpack.c.l.b16 %v221
  %v238 = vunpack.c.h.b16 %v221
  %v239 = vunpack.c.l.b16 %v222
  %v240 = vunpack.c.h.b16 %v222
  %v241 = vunpack.c.l.b16 %v223
  %v242 = vunpack.c.h.b16 %v223
  %v243 = vunpack.c.l.b16 %v224
  %v244 = vunpack.c.h.b16 %v224
  %v245 = vunpack.c.l.b16 %v225
  %v246 = vunpack.c.h.b16 %v225
  %v247 = vunpack.c.l.b16 %v226
  %v248 = vunpack.c.h.b16 %v226
  %v249 = vunpack.c.l.b16 %v227
  %v250 = vunpack.c.h.b16 %v227
  %v251 = vunpack.c.l.b16 %v228
  %v252 = vunpack.c.h.b16 %v228
  %v253 = vpack.c.b16 %v237, %v237
  %v254 = vpack.c.b16 %v238, %v238
  %v255 = vpack.c.b16 %v239, %v239
  %v256 = vpack.c.b16 %v240, %v240
  %v257 = vpack.c.b16 %v241, %v241
  %v258 = vpack.c.b16 %v242, %v242
  %v259 = vpack.c.b16 %v243, %v243
  %v260 = vpack.c.b16 %v244, %v244
  %v261 = vpack.c.b16 %v245, %v245
  %v262 = vpack.c.b16 %v246, %v246
  %v263 = vpack.c.b16 %v247, %v247
  %v264 = vpack.c.b16 %v248, %v248
  %v265 = vpack.c.b16 %v249, %v249
  %v266 = vpack.c.b16 %v250, %v250
  %v267 = vpack.c.b16 %v251, %v251
  %v268 = vpack.c.b16 %v252, %v252
  %vm285 = vcmask 60416
  %286 = vst.msk [vmem:[%s3] sm:$0xf] %vm285, %v253
  %287 = vst.msk [vmem:[%s3 + $0x4] sm:$0xf] %vm285, %v254
  %288 = vst.msk [vmem:[%s3 + $0x8] sm:$0xf] %vm285, %v255
  %289 = vst.msk [vmem:[%s3 + $0xc] sm:$0xf] %vm285, %v256
  %290 = vst.msk [vmem:[%s3 + $0x10] sm:$0xf] %vm285, %v257
  %291 = vst.msk [vmem:[%s3 + $0x14] sm:$0xf] %vm285, %v258
  %292 = vst.msk [vmem:[%s3 + $0x18] sm:$0xf] %vm285, %v259
  %293 = vst.msk [vmem:[%s3 + $0x1c] sm:$0xf] %vm285, %v260
  %294 = vst.msk [vmem:[%s3 + $0x20] sm:$0xf] %vm285, %v261
  %295 = vst.msk [vmem:[%s3 + $0x24] sm:$0xf] %vm285, %v262
  %296 = vst.msk [vmem:[%s3 + $0x28] sm:$0xf] %vm285, %v263
  %297 = vst.msk [vmem:[%s3 + $0x2c] sm:$0xf] %vm285, %v264
  %298 = vst.msk [vmem:[%s3 + $0x30] sm:$0xf] %vm285, %v265
  %299 = vst.msk [vmem:[%s3 + $0x34] sm:$0xf] %vm285, %v266
  %300 = vst.msk [vmem:[%s3 + $0x38] sm:$0xf] %vm285, %v267
  %301 = vst.msk [vmem:[%s3 + $0x3c] sm:$0xf] %vm285, %v268
  // Predicated region
  $region14: #{tpu_custom_call.1} parent=0 // pred_check
    _
  $region15: #{tpu_custom_call.1} parent=0 // pred_check_branch
    %303 = sbr.rel (0) target = $region17
  $region16: #{tpu_custom_call.1} parent=0 // pred_region
    _
  $region17: #{tpu_custom_call.1} parent=0 // pred_fallthru
    _
  // Predicated region
  $region18: #{tpu_custom_call.1} parent=0 // pred_check
    _
  $region19: #{tpu_custom_call.1} parent=0 // pred_check_branch
    %305 = sbr.rel (0) target = $region21
  $region20: #{tpu_custom_call.1} parent=0 // pred_region
    _
  $region21: #{tpu_custom_call.1} parent=0 // pred_fallthru
    _

</llo_original>
